<compile_context>
chip_gen: v7x
topology: tpu7x:2x2x1
jax: 0.10.0
libtpu: 0.0.40
codegen_flags: <defaults>
</compile_context>

<pallas_src>
import functools

import jax
import jax.numpy as jnp
from jax.experimental import pallas as pl
from jax.experimental.pallas import tpu as pltpu


# ---------------------------------------------------------------------------
# Kernels (pure lane-dense streaming multiply; no PRNG inside the hot path).
# ---------------------------------------------------------------------------
def _drop_path_kernel(scale_ref, x_ref, o_ref):
    # scale_ref: (bb, 1)  -- 0 or 1/keep_prob per sample, already in x dtype.
    # x_ref / o_ref: (bb, tc) lane-dense blocks of the flattened activations.
    o_ref[...] = x_ref[...] * scale_ref[...]


def _drop_path_residual_kernel(scale_ref, x_ref, r_ref, o_ref):
    # Fused residual add: out = residual + x * scale.  Saves one full HBM
    # read+write pass of the activation vs. standalone DropPath + add.
    o_ref[...] = r_ref[...] + x_ref[...] * scale_ref[...]


# ---------------------------------------------------------------------------
# Block sizing.
# ---------------------------------------------------------------------------
def _target_block_bytes():
    """Per-generation streaming block target (bytes)."""
    try:
        kind = jax.devices()[0].device_kind.lower()
    except Exception:  # pragma: no cover - device query should not fail
        kind = ""
    if "v7" in kind:
        return 6 << 20          # v7x: fewer, larger steps; 64 MiB/TC VMEM
    if "v5 lite" in kind or "v5e" in kind or "v5lite" in kind:
        return 2 << 20          # v5e: stay well inside the small scoped VMEM
    return 4 << 20              # v6e and default


def _choose_tiles(B, NC, itemsize, target_bytes, min_steps=8):
    """Pick (samples_per_block bb, columns_per_block tc) for a (B, NC) view."""
    # Column tile: lane-dense multiple of 128, or the full (already dense) row.
    if NC % 128 == 0 and NC * itemsize > target_bytes:
        tc = max(128, min(NC, (target_bytes // itemsize) // 128 * 128))
    else:
        tc = NC
    col_steps = pl.cdiv(NC, tc)

    # Batch tile: fill the target, but keep enough grid steps for pipelining
    # and v7x megacore sharding.
    bb = max(1, target_bytes // max(tc * itemsize, 1))
    want_batch_blocks = max(1, -(-min_steps // col_steps))         # ceil div
    bb = min(bb, max(1, B // want_batch_blocks), B)

    # Sublane constraint on the 2nd-to-last block dim: full B or multiple of 8.
    if bb < B:
        bb = (bb // 8) * 8 if bb >= 8 else min(B, 8)
        if bb >= B:
            bb = B
    return int(bb), int(tc)


# ---------------------------------------------------------------------------
# Wrapper.
# ---------------------------------------------------------------------------
def drop_path(x, drop_prob=0.0, training=False, *, key=None, seed=0,
              residual=None, block_bytes=None):
    """Pallas DropPath.  x: (B, ...).  Optional fused `residual` add.

    jit-friendly: drop_prob / training / seed are Python-level (static), key
    and residual are traced arrays.
    """
    if drop_prob is None:
        drop_prob = 0.0
    if drop_prob == 0.0 or not training:
        return x if residual is None else x + residual
    if drop_prob >= 1.0:                       # keep_prob == 0: drop everything
        zeros = jnp.zeros_like(x)
        return zeros if residual is None else zeros + residual

    orig_shape = x.shape
    B = orig_shape[0]
    NC = 1
    for d in orig_shape[1:]:
        NC *= int(d)
    keep_prob = 1.0 - float(drop_prob)

    if key is None:
        key = jax.random.PRNGKey(seed)
    # Per-sample Bernoulli(keep_prob), exactly like the torch reference;
    # scale = mask / keep_prob, pre-cast to x.dtype (no per-block astype).
    u = jax.random.uniform(key, (B, 1), dtype=jnp.float32)
    scale = (jnp.floor(keep_prob + u) * (1.0 / keep_prob)).astype(x.dtype)

    # Lane-dense 2D view: (B, N*D).  Reshape is free under XLA.
    x2 = x.reshape(B, NC)

    itemsize = jnp.dtype(x.dtype).itemsize
    target = int(block_bytes) if block_bytes is not None else _target_block_bytes()
    bb, tc = _choose_tiles(B, NC, itemsize, target)
    grid = (pl.cdiv(B, bb), pl.cdiv(NC, tc))

    # Explicit scoped-VMEM limit sized from the double-buffered resident set.
    block_b = bb * tc * itemsize
    n_streamed = 2 if residual is None else 3            # x, out (+ residual)
    resident = 2 * n_streamed * block_b + 4096            # 2 bufs per array
    vmem_limit = int(min(max(32 << 20, (resident * 3) // 2), 48 << 20))

    x_spec = pl.BlockSpec((bb, tc), lambda i, j: (i, j))
    scale_spec = pl.BlockSpec((bb, 1), lambda i, j: (i, 0))

    if residual is None:
        kernel = _drop_path_kernel
        operands = (scale, x2)
        in_specs = [scale_spec, x_spec]
    else:
        kernel = _drop_path_residual_kernel
        operands = (scale, x2, residual.reshape(B, NC))
        in_specs = [scale_spec, x_spec, x_spec]

    out = pl.pallas_call(
        kernel,
        out_shape=jax.ShapeDtypeStruct((B, NC), x.dtype),
        grid=grid,
        in_specs=in_specs,
        out_specs=x_spec,
        compiler_params=pltpu.CompilerParams(
            dimension_semantics=("parallel", "parallel"),
            vmem_limit_bytes=vmem_limit),
    )(*operands)
    # TODO(synk): for non-trivial drop_prob, dropped samples could skip the HBM
    # read entirely (PrefetchScalarGridSpec mask in SMEM + memory_space=pl.ANY
    # + conditional make_async_copy); left out to keep the streaming path simple.
    return out.reshape(orig_shape)


class DropPath:
    """Drop paths (Stochastic Depth) per sample — Pallas/JAX version."""

    def __init__(self, drop_prob=None):
        self.drop_prob = drop_prob
        self.training = True
        self._step = 0                      # avoids silently reusing one mask

    def __call__(self, x, key=None, seed=None, residual=None):
        p = 0.0 if self.drop_prob is None else float(self.drop_prob)
        if key is None and seed is None:
            seed = self._step
            self._step += 1
        return drop_path(x, p, self.training, key=key,
                         seed=0 if seed is None else int(seed),
                         residual=residual)

    def extra_repr(self) -> str:
        return "p={}".format(self.drop_prob)


# ---------------------------------------------------------------------------
# Self-test.
# ---------------------------------------------------------------------------
if __name__ == "__main__":
    key = jax.random.PRNGKey(0)
    B, N, D = 2, 8, 32
    x = jax.random.normal(key, (B, N, D), dtype=jnp.float32)

    keep_prob = 0.75
    module = DropPath(drop_prob=0.25)

    # 1) Training mode: per-sample stochastic drop with 1/keep_prob rescale.
    module.training = True
    y = jax.block_until_ready(module(x, seed=42))
    for b in range(B):
        dropped = bool(jnp.allclose(y[b], 0.0, atol=1e-6))
        kept = bool(jnp.allclose(y[b], x[b] / keep_prob, atol=1e-5))
        assert dropped or kept, f"sample {b}: not a valid drop-path output"

    # 2) jit path with an explicit key matches the eager result for same key.
    fwd = jax.jit(functools.partial(drop_path, drop_prob=0.25, training=True))
    y_jit = jax.block_until_ready(fwd(x, key=jax.random.PRNGKey(42)))
    assert bool(jnp.allclose(y_jit, y, atol=1e-6)), "jit vs eager mismatch"

    # 3) Fused residual path == standalone DropPath + add (same key).
    r = jax.random.normal(jax.random.PRNGKey(1), (B, N, D), dtype=jnp.float32)
    y_fused = jax.block_until_ready(
        drop_path(x, 0.25, True, key=jax.random.PRNGKey(42), residual=r))
    assert bool(jnp.allclose(y_fused, y + r, atol=1e-5)), "fused residual mismatch"

    # 4) Eval mode: identity.
    module.training = False
    y_eval = jax.block_until_ready(module(x))
    assert bool(jnp.allclose(y_eval, x)), "eval mode must be identity"

    # 5) drop_prob == 1.0 edge case: all-zero, no inf/NaN.
    module2 = DropPath(drop_prob=1.0)
    module2.training = True
    y_all = jax.block_until_ready(module2(x, seed=7))
    assert bool(jnp.allclose(y_all, 0.0)), "drop_prob=1.0 must zero everything"

    # 6) Non-divisible B / edge blocks on both grid axes (tiny block_bytes
    #    forces column tiling) — exact match vs. a pure-JAX reference.
    B2, N2, D2 = 12, 18, 128
    x2 = jax.random.normal(jax.random.PRNGKey(2), (B2, N2, D2), jnp.float32)
    k2 = jax.random.PRNGKey(3)
    kp2 = 0.7
    u2 = jax.random.uniform(k2, (B2, 1), dtype=jnp.float32)
    ref2 = x2 * (jnp.floor(kp2 + u2) * (1.0 / kp2)).astype(x2.dtype).reshape(B2, 1, 1)
    y2 = jax.block_until_ready(drop_path(x2, 0.3, True, key=k2, block_bytes=4096))
    assert bool(jnp.allclose(y2, ref2, atol=1e-5)), "edge-block case mismatch"

    # 7) Trailing size not a multiple of 128 (falls back to full-row blocks).
    B3, N3, D3 = 5, 7, 48
    x3 = jax.random.normal(jax.random.PRNGKey(4), (B3, N3, D3), jnp.float32)
    y3 = jax.block_until_ready(drop_path(x3, 0.5, True, key=jax.random.PRNGKey(5)))
    for b in range(B3):
        dropped = bool(jnp.allclose(y3[b], 0.0, atol=1e-6))
        kept = bool(jnp.allclose(y3[b], x3[b] / 0.5, atol=1e-5))
        assert dropped or kept, f"sample {b}: not a valid drop-path output"

    print("KERNEL_OK")
</pallas_src>

<mosaic_0001>
module attributes {stable_mosaic.version = 11 : i64} {
  func.func @_drop_path_kernel(%arg0: i32, %arg1: i32, %arg2: memref<2x1xf32, #tpu.memory_space<vmem>>, %arg3: memref<2x256xf32, #tpu.memory_space<vmem>>, %arg4: memref<2x256xf32, #tpu.memory_space<vmem>>) attributes {dimension_semantics = [#tpu.dimension_semantics<parallel>, #tpu.dimension_semantics<parallel>], iteration_bounds = array<i64: 1, 1>, scalar_prefetch = 0 : i64, scratch_operands = 0 : i64, tpu.core_type = #tpu.core_type<tc>, window_params = [{transform_indices = @transform_0, window_bounds = array<i64: 2, 1>}, {transform_indices = @transform_1, window_bounds = array<i64: 2, 256>}, {transform_indices = @transform_2, window_bounds = array<i64: 2, 256>}]} {
    %c0 = arith.constant 0 : index
    %c0_0 = arith.constant 0 : index
    %0 = vector.load %arg3[%c0, %c0_0] : memref<2x256xf32, #tpu.memory_space<vmem>>, vector<2x256xf32>
    %c0_1 = arith.constant 0 : index
    %c0_2 = arith.constant 0 : index
    %1 = vector.load %arg2[%c0_1, %c0_2] : memref<2x1xf32, #tpu.memory_space<vmem>>, vector<2x1xf32>
    %2 = vector.broadcast %1 : vector<2x1xf32> to vector<2x256xf32>
    %3 = arith.mulf %0, %2 : vector<2x256xf32>
    %c0_3 = arith.constant 0 : index
    %c0_4 = arith.constant 0 : index
    %4 = vector.load %arg4[%c0_3, %c0_4] : memref<2x256xf32, #tpu.memory_space<vmem>>, vector<2x256xf32>
    tpu.vector_store %arg4[%c0_3, %c0_4], %3 {strides = array<i32>} : memref<2x256xf32, #tpu.memory_space<vmem>>, vector<2x256xf32>,
    return
  }
  func.func @transform_0(%arg0: i32, %arg1: i32) -> (i32, i32) {
    %c0_i32 = arith.constant 0 : i32
    %c0_i32_0 = arith.constant 0 : i32
    return %arg0, %c0_i32 : i32, i32
  }
  func.func @transform_1(%arg0: i32, %arg1: i32) -> (i32, i32) {
    %c0_i32 = arith.constant 0 : i32
    return %arg0, %arg1 : i32, i32
  }
  func.func @transform_2(%arg0: i32, %arg1: i32) -> (i32, i32) {
    %c0_i32 = arith.constant 0 : i32
    return %arg0, %arg1 : i32, i32
  }
}

</mosaic_0001>

<llo_original>
// kernel: tpu_custom_call.1
$region0: #{tpu_custom_call.1}
  #allocation0 [shape = 'u32[]', space=smem, size = 0x4, offset = 0x4, fixed_abs, tag = 'smem constant byte address 0x4 - core index']
  #allocation1 [shape = 'u32[144,128]{1,0:T(1,128)}', space=vmem, size = 0x12000, scoped, tag = 'internal scratch']
  %s0 = inlined_call_operand.vmem [shape: f32[2,1], index: 0, kind: input, shape index: {}]
  %s1 = inlined_call_operand.vmem [shape: f32[2,256], index: 1, kind: input, shape index: {}]
  %s2 = inlined_call_operand.hbm [shape: f32[2,256], index: 2, kind: output, shape index: {}]
  %s3 = sld [smem:[#allocation0]]
  $region18: #{tpu_custom_call.1} parent=0
    _
  %s5 = ssub.s32 1, %s3
  %s6 = scalar_select 0, %s5, %s3
  $region1: #{tpu_custom_call.1} parent=0
    #allocation2 [shape = 'u8[2048]{0}', space=vmem, size = 0x800, scoped, tag = 'output window, operand 0, single buffered']
    #allocation3 [shape = 's32[1]{0}', space=sflag, size = 0x4, scoped, tag = 'scoped memory for tpu_custom_call.1']
    %7 = vsyncpa [#allocation3], 0
    // Predicated region
    $region2: #{tpu_custom_call.1} parent=1 // pred_check
      _
    $region3: #{tpu_custom_call.1} parent=1 // pred_check_branch
      %9 = sbr.rel (0) target = $region5
    $region4: #{tpu_custom_call.1} parent=1 // pred_region
      _
    $region5: #{tpu_custom_call.1} parent=1 // pred_fallthru
      _
    // Predicated region
    $region6: #{tpu_custom_call.1} parent=1 // pred_check
      _
    $region7: #{tpu_custom_call.1} parent=1 // pred_check_branch
      %11 = sbr.rel (0) target = $region9
    $region8: #{tpu_custom_call.1} parent=1 // pred_region
      _
    $region9: #{tpu_custom_call.1} parent=1 // pred_fallthru
      _
    %v12 = vld [vmem:[%s1] sm:$0xf]
    %v13 = vld [vmem:[%s0] sm:$0x3]
    %15 = vset.pattern.permute.xlu0 0
    %16 = vperm.xlu0 %15, %v13
    %v17 = vpop.permute.xlu0 %16
    %v19 = vunpack.c.l.s4 269488144
    %v20 = vunpack.c.0.s8 %v19
    %v21 = vlaneseq
    %v22 = vshrl.u32 %v21, 7
    %v23 = vsub.s32 %v20, %v22
    %v24 = vrot.slane %v17, %v23
    %v26 = vmul.f32 %v12, %v24
    %27 = vst [vmem:[#allocation2] sm:$0xf] %v26
    // Predicated region
    $region10: #{tpu_custom_call.1} parent=1 // pred_check
      _
    $region11: #{tpu_custom_call.1} parent=1 // pred_check_branch
      %29 = sbr.rel (0) target = $region13
    $region12: #{tpu_custom_call.1} parent=1 // pred_region
      %s31 = ssub.s32 64, 64
      %32 = vsyncadd [#allocation3], %s31
      %s34 = sshll.u32 [#allocation2], 4
      %s35 = int_to_ptr.vmem [resolvable:$true] %s34
      %37 = dma.vmem_to_hbm [thread:$0]  %s35, 64, %s2, [#allocation3]
    $region13: #{tpu_custom_call.1} parent=1 // pred_fallthru
      _
    // Predicated region
    $region14: #{tpu_custom_call.1} parent=1 // pred_check
      _
    $region15: #{tpu_custom_call.1} parent=1 // pred_check_branch
      %39 = sbr.rel (0) target = $region17
    $region16: #{tpu_custom_call.1} parent=1 // pred_region
      %40 = dma.done [#allocation3], 64
    $region17: #{tpu_custom_call.1} parent=1 // pred_fallthru
      _
    %41 = vsyncpa [#allocation3], 1

</llo_original>
